<compile_context>
chip_gen: v5e
topology: v5e:2x2
jax: 0.10.0
libtpu: 0.0.40
codegen_flags: <defaults>
</compile_context>

<pallas_src>
import math

import jax
import jax.numpy as jnp
from jax.experimental import pallas as pl
from jax.experimental.pallas import tpu as pltpu


# ---------------------------------------------------------------------------
# Shared math helpers
# ---------------------------------------------------------------------------
def _layer_norm(x, gamma, beta, eps=1e-12):
    mu = jnp.mean(x, axis=-1, keepdims=True)
    var = jnp.mean(jnp.square(x - mu), axis=-1, keepdims=True)
    return (x - mu) * jax.lax.rsqrt(var + eps) * gamma + beta


def _gelu_tanh(x):
    c = math.sqrt(2.0 / math.pi)
    return 0.5 * x * (1.0 + jnp.tanh(c * (x + 0.044715 * x * x * x)))


def _softmax_exact(x):                      # reference path (plain JAX)
    m = jnp.max(x, axis=-1, keepdims=True)
    e = jnp.exp(x - m)
    return e / jnp.sum(e, axis=-1, keepdims=True)


def _softmax_eup(x):                        # in-kernel: divide -> EUP reciprocal slot
    m = jnp.max(x, axis=-1, keepdims=True)
    e = jnp.exp(x - m)
    return e * pl.reciprocal(jnp.sum(e, axis=-1, keepdims=True), approx=True)


def _dot(a, w):
    # cast activation to the weight dtype (bf16 or f32), accumulate in f32 on the MXU
    return jnp.dot(a.astype(w.dtype), w, preferred_element_type=jnp.float32)


# ---------------------------------------------------------------------------
# BlockSpec / CompilerParams helpers
# ---------------------------------------------------------------------------
def _const_spec(shape):
    """Constant-index (weight) BlockSpec; single-buffered when supported (saves VMEM)."""
    idx = lambda *_: (0,) * len(shape)
    try:
        return pl.BlockSpec(shape, idx, pipeline_mode=pl.Buffered(1))
    except Exception:                       # older jax without pipeline_mode
        return pl.BlockSpec(shape, idx)


def _compiler_params():
    try:
        cap = int(pltpu.get_tpu_info().vmem_capacity_bytes)
    except Exception:
        cap = 64 * 1024 * 1024              # conservative fallback (v7x per-core VMEM)
    vlim = int(min(cap * 85 // 100, 100 * 1024 * 1024))
    return pltpu.CompilerParams(dimension_semantics=("parallel",),
                                vmem_limit_bytes=vlim)


def _pick_tile_m(tokens):
    for t in (512, 256, 128, 64, 32, 16, 8):
        if tokens % t == 0 and tokens // t >= 2:
            return t
    return tokens


# ---------------------------------------------------------------------------
# Kernels
# ---------------------------------------------------------------------------
def _embed_kernel(wt_ref, pe_ref, g_ref, b_ref, o_ref):
    """(word+type) embeddings + position embeddings, then LayerNorm (per batch tile)."""
    bB, S, H = wt_ref.shape
    x = (wt_ref[...].astype(jnp.float32) + pe_ref[...][None, :, :]).reshape(bB * S, H)
    y = _layer_norm(x, g_ref[...], b_ref[...])
    o_ref[...] = y.reshape(bB, S, H).astype(o_ref.dtype)


def _make_attn_kernel(num_heads, head_dim):
    """Self-attention + residual + LayerNorm for one batch tile.

    Heads are handled with batched (B*nh) einsums; the output projection is a single
    full-K (H) matmul.  1/sqrt(head_dim) is pre-folded into w_q/b_q by prepare_params.
    """

    def kernel(x_ref, bias_ref, wq_ref, bq_ref, wk_ref, bk_ref, wv_ref, bv_ref,
               wo_ref, bo_ref, g1_ref, b1_ref, o_ref):
        bB, S, H = x_ref.shape
        cdt = wq_ref.dtype                                   # bf16 or f32 matmul operands
        x2 = x_ref[...].astype(jnp.float32).reshape(bB * S, H)
        xm = x2.astype(cdt)

        q = _dot(xm, wq_ref[...]) + bq_ref[...]              # (bB*S, H), f32 accumulate
        k = _dot(xm, wk_ref[...]) + bk_ref[...]
        v = _dot(xm, wv_ref[...]) + bv_ref[...]

        def to_heads(t):                                     # (bB*S,H) -> (bB*nh, S, hd)
            return (t.reshape(bB, S, num_heads, head_dim)
                     .transpose(0, 2, 1, 3)
                     .reshape(bB * num_heads, S, head_dim)
                     .astype(cdt))

        q3, k3, v3 = to_heads(q), to_heads(k), to_heads(v)

        s = jnp.einsum('bqd,bkd->bqk', q3, k3,
                       preferred_element_type=jnp.float32)   # (bB*nh, S, S)
        bias = jnp.broadcast_to(bias_ref[...][:, None, :, :],
                                (bB, num_heads, 1, S)).reshape(bB * num_heads, 1, S)
        p = _softmax_eup(s + bias)                           # f32 softmax
        c = jnp.einsum('bqk,bkd->bqd', p.astype(cdt), v3,
                       preferred_element_type=jnp.float32)   # (bB*nh, S, hd)

        c2 = (c.reshape(bB, num_heads, S, head_dim)
               .transpose(0, 2, 1, 3)
               .reshape(bB * S, H)
               .astype(cdt))
        attn = _dot(c2, wo_ref[...]) + bo_ref[...]           # single K=H output projection

        h1 = _layer_norm(x2 + attn, g1_ref[...], b1_ref[...])
        o_ref[...] = h1.reshape(bB, S, H).astype(o_ref.dtype)

    return kernel


def _ffn_kernel(h1_ref, wi_ref, bi_ref, wf_ref, bf_ref, g2_ref, b2_ref, o_ref):
    """Token-tiled GELU feed-forward + residual + LayerNorm on a (TILE_M, H) slab."""
    h1 = h1_ref[...].astype(jnp.float32)                     # (TM, H)
    f = _gelu_tanh(_dot(h1, wi_ref[...]) + bi_ref[...])      # (TM, I), f32
    f = _dot(f, wf_ref[...]) + bf_ref[...]                   # (TM, H), f32
    o_ref[...] = _layer_norm(h1 + f, g2_ref[...], b2_ref[...]).astype(o_ref.dtype)


def _heads_kernel(lh_ref, mask_ref, wp_ref, bp_ref, mean_ref, pool_ref):
    """Mask-weighted mean pooling (module._mean_pooling) + BERT pooler tanh(cls @ W + b)."""
    lh = lh_ref[...].astype(jnp.float32)                     # (tb, S, H)
    m3 = mask_ref[...].astype(jnp.float32)[:, :, None]       # (tb, S, 1)
    summed = jnp.sum(lh * m3, axis=1)                        # (tb, H)
    denom = jnp.maximum(jnp.sum(m3, axis=1), 1e-9)           # == torch.clamp(min=1e-9)
    mean_ref[...] = (summed / denom).astype(mean_ref.dtype)

    cls = lh[:, 0, :]                                        # [CLS] token
    pool = jnp.tanh(_dot(cls, wp_ref[...]) + bp_ref[...])
    pool_ref[...] = pool.astype(pool_ref.dtype)


# ---------------------------------------------------------------------------
# Parameters
# ---------------------------------------------------------------------------
def init_params(key, *, vocab_size, max_pos, type_vocab, hidden, intermediate, layers):
    std = 0.02
    keys = jax.random.split(key, 4 + layers)
    p = {
        "word_emb": jax.random.normal(keys[0], (vocab_size, hidden), jnp.float32) * std,
        "pos_emb": jax.random.normal(keys[1], (max_pos, hidden), jnp.float32) * std,
        "type_emb": jax.random.normal(keys[2], (type_vocab, hidden), jnp.float32) * std,
        "emb_ln_g": jnp.ones((1, hidden), jnp.float32),
        "emb_ln_b": jnp.zeros((1, hidden), jnp.float32),
        "layers": [],
    }
    for l in range(layers):
        k = jax.random.split(keys[3 + l], 6)
        p["layers"].append(dict(
            w_q=jax.random.normal(k[0], (hidden, hidden), jnp.float32) * std,
            b_q=jnp.zeros((1, hidden), jnp.float32),
            w_k=jax.random.normal(k[1], (hidden, hidden), jnp.float32) * std,
            b_k=jnp.zeros((1, hidden), jnp.float32),
            w_v=jax.random.normal(k[2], (hidden, hidden), jnp.float32) * std,
            b_v=jnp.zeros((1, hidden), jnp.float32),
            w_o=jax.random.normal(k[3], (hidden, hidden), jnp.float32) * std,
            b_o=jnp.zeros((1, hidden), jnp.float32),
            ln1_g=jnp.ones((1, hidden), jnp.float32),
            ln1_b=jnp.zeros((1, hidden), jnp.float32),
            w_i=jax.random.normal(k[4], (hidden, intermediate), jnp.float32) * std,
            b_i=jnp.zeros((1, intermediate), jnp.float32),
            w_f=jax.random.normal(k[5], (intermediate, hidden), jnp.float32) * std,
            b_f=jnp.zeros((1, hidden), jnp.float32),
            ln2_g=jnp.ones((1, hidden), jnp.float32),
            ln2_b=jnp.zeros((1, hidden), jnp.float32),
        ))
    p["w_pool"] = jax.random.normal(keys[-1], (hidden, hidden), jnp.float32) * std
    p["b_pool"] = jnp.zeros((1, hidden), jnp.float32)
    return p


def prepare_params(raw, compute_dtype, *, num_heads):
    """Pre-cast matmul weights to compute_dtype once and fold 1/sqrt(hd) into w_q/b_q."""
    H = raw["word_emb"].shape[1]
    scale = 1.0 / math.sqrt(H // num_heads)
    p = {k: v for k, v in raw.items() if k != "layers"}
    p["w_pool"] = raw["w_pool"].astype(compute_dtype)
    layers = []
    for lp in raw["layers"]:
        layers.append(dict(
            w_q=(lp["w_q"] * scale).astype(compute_dtype), b_q=lp["b_q"] * scale,
            w_k=lp["w_k"].astype(compute_dtype), b_k=lp["b_k"],
            w_v=lp["w_v"].astype(compute_dtype), b_v=lp["b_v"],
            w_o=lp["w_o"].astype(compute_dtype), b_o=lp["b_o"],
            ln1_g=lp["ln1_g"], ln1_b=lp["ln1_b"],
            w_i=lp["w_i"].astype(compute_dtype), b_i=lp["b_i"],
            w_f=lp["w_f"].astype(compute_dtype), b_f=lp["b_f"],
            ln2_g=lp["ln2_g"], ln2_b=lp["ln2_b"],
        ))
    p["layers"] = layers
    return p


# ---------------------------------------------------------------------------
# Forward (Pallas)
# ---------------------------------------------------------------------------
def pretrain_bert_crd_forward(params, input_ids, token_type_ids, attention_mask, *,
                              num_heads):
    B, S = input_ids.shape
    H = params["word_emb"].shape[1]
    head_dim = H // num_heads
    tokens = B * S
    n_layers = len(params["layers"])
    compute_dtype = params["layers"][0]["w_q"].dtype
    hidden_store = jnp.bfloat16 if compute_dtype == jnp.bfloat16 else jnp.float32
    cparams = _compiler_params()

    # Embedding-table gathers (dynamic row lookups) stay in plain JAX; XLA fuses both
    # gathers + the add into one (B,S,H) write.  Everything after is Pallas.
    wt = (jnp.take(params["word_emb"], input_ids, axis=0)
          + jnp.take(params["type_emb"], token_type_ids, axis=0))
    pe = params["pos_emb"][:S]

    hidden = pl.pallas_call(
        _embed_kernel,
        out_shape=jax.ShapeDtypeStruct((B, S, H), hidden_store),
        grid_spec=pltpu.PrefetchScalarGridSpec(
            num_scalar_prefetch=0, grid=(B,),
            in_specs=[
                pl.BlockSpec((1, S, H), lambda b: (b, 0, 0)),
                _const_spec((S, H)),
                _const_spec((1, H)),
                _const_spec((1, H)),
            ],
            out_specs=pl.BlockSpec((1, S, H), lambda b: (b, 0, 0)),
        ),
        compiler_params=cparams,
    )(wt, pe, params["emb_ln_g"], params["emb_ln_b"])

    # Additive attention bias: 0 where attended, -1e9 where masked; shape (B, 1, S).
    bias = ((attention_mask.astype(jnp.float32) - 1.0) * 1e9).reshape(B, 1, S)

    attn_kernel = _make_attn_kernel(num_heads, head_dim)
    tile_m = _pick_tile_m(tokens)

    for li, lp in enumerate(params["layers"]):
        I = lp["w_i"].shape[1]

        # --- attention + add&norm, one batch element per grid step -------------
        h1 = pl.pallas_call(
            attn_kernel,
            out_shape=jax.ShapeDtypeStruct((B, S, H), hidden_store),
            grid_spec=pltpu.PrefetchScalarGridSpec(
                num_scalar_prefetch=0, grid=(B,),
                in_specs=[
                    pl.BlockSpec((1, S, H), lambda b: (b, 0, 0)),   # x
                    pl.BlockSpec((1, 1, S), lambda b: (b, 0, 0)),   # mask bias
                    _const_spec((H, H)), _const_spec((1, H)),       # w_q, b_q
                    _const_spec((H, H)), _const_spec((1, H)),       # w_k, b_k
                    _const_spec((H, H)), _const_spec((1, H)),       # w_v, b_v
                    _const_spec((H, H)), _const_spec((1, H)),       # w_o, b_o
                    _const_spec((1, H)), _const_spec((1, H)),       # ln1
                ],
                out_specs=pl.BlockSpec((1, S, H), lambda b: (b, 0, 0)),
            ),
            compiler_params=cparams,
        )(hidden, bias,
          lp["w_q"], lp["b_q"], lp["w_k"], lp["b_k"], lp["w_v"], lp["b_v"],
          lp["w_o"], lp["b_o"], lp["ln1_g"], lp["ln1_b"])

        # --- token-tiled FFN + add&norm -----------------------------------------
        out_dt = jnp.float32 if li == n_layers - 1 else hidden_store
        h2 = pl.pallas_call(
            _ffn_kernel,
            out_shape=jax.ShapeDtypeStruct((tokens, H), out_dt),
            grid_spec=pltpu.PrefetchScalarGridSpec(
                num_scalar_prefetch=0, grid=(tokens // tile_m,),
                in_specs=[
                    pl.BlockSpec((tile_m, H), lambda m: (m, 0)),    # h1 tokens
                    _const_spec((H, I)), _const_spec((1, I)),       # w_i, b_i
                    _const_spec((I, H)), _const_spec((1, H)),       # w_f, b_f
                    _const_spec((1, H)), _const_spec((1, H)),       # ln2
                ],
                out_specs=pl.BlockSpec((tile_m, H), lambda m: (m, 0)),
            ),
            compiler_params=cparams,
        )(h1.reshape(tokens, H), lp["w_i"], lp["b_i"], lp["w_f"], lp["b_f"],
          lp["ln2_g"], lp["ln2_b"])
        hidden = h2.reshape(B, S, H)

    last_hidden = hidden                                     # f32

    tile_b = 8 if (B > 8 and B % 8 == 0) else B
    hidden_mean, pooler = pl.pallas_call(
        _heads_kernel,
        out_shape=(jax.ShapeDtypeStruct((B, H), jnp.float32),
                   jax.ShapeDtypeStruct((B, H), jnp.float32)),
        grid_spec=pltpu.PrefetchScalarGridSpec(
            num_scalar_prefetch=0, grid=(B // tile_b,),
            in_specs=[
                pl.BlockSpec((tile_b, S, H), lambda b: (b, 0, 0)),
                pl.BlockSpec((tile_b, S), lambda b: (b, 0)),
                _const_spec((H, H)), _const_spec((1, H)),
            ],
            out_specs=(pl.BlockSpec((tile_b, H), lambda b: (b, 0)),
                       pl.BlockSpec((tile_b, H), lambda b: (b, 0))),
        ),
        compiler_params=cparams,
    )(last_hidden, attention_mask.astype(jnp.float32),
      params["w_pool"], params["b_pool"])

    # Module returns: last_hidden_state, hidden_mean, pooler_output,
    #                 hidden_mean_mlp (alias), pooler_output_mlp (alias)
    return last_hidden, hidden_mean, pooler, hidden_mean, pooler


# ---------------------------------------------------------------------------
# Pure-JAX reference (raw f32 params, conventional multi-head formulation)
# ---------------------------------------------------------------------------
def reference_forward(raw, input_ids, token_type_ids, attention_mask, *, num_heads):
    B, S = input_ids.shape
    H = raw["word_emb"].shape[1]
    hd = H // num_heads
    x = (jnp.take(raw["word_emb"], input_ids, axis=0)
         + raw["pos_emb"][:S][None, :, :]
         + jnp.take(raw["type_emb"], token_type_ids, axis=0))
    x = _layer_norm(x, raw["emb_ln_g"], raw["emb_ln_b"])
    mask = attention_mask.astype(jnp.float32)
    bias = (mask - 1.0) * 1e9

    for lp in raw["layers"]:
        x2 = x.reshape(B * S, H)
        q = x2 @ lp["w_q"] + lp["b_q"]
        k = x2 @ lp["w_k"] + lp["b_k"]
        v = x2 @ lp["w_v"] + lp["b_v"]
        to_heads = lambda t: t.reshape(B, S, num_heads, hd).transpose(0, 2, 1, 3)
        q, k, v = to_heads(q), to_heads(k), to_heads(v)
        s = jnp.einsum('bhqd,bhkd->bhqk', q, k) / math.sqrt(hd)
        p = _softmax_exact(s + bias[:, None, None, :])
        c = jnp.einsum('bhqk,bhkd->bhqd', p, v)
        c = c.transpose(0, 2, 1, 3).reshape(B * S, H)
        attn = c @ lp["w_o"] + lp["b_o"]
        h1 = _layer_norm(x2 + attn, lp["ln1_g"], lp["ln1_b"])
        f = _gelu_tanh(h1 @ lp["w_i"] + lp["b_i"])
        f = f @ lp["w_f"] + lp["b_f"]
        x = _layer_norm(h1 + f, lp["ln2_g"], lp["ln2_b"]).reshape(B, S, H)

    last_hidden = x
    m3 = mask[:, :, None]
    hidden_mean = jnp.sum(last_hidden * m3, axis=1) / jnp.maximum(jnp.sum(m3, axis=1), 1e-9)
    pooler = jnp.tanh(last_hidden[:, 0, :] @ raw["w_pool"] + raw["b_pool"])
    return last_hidden, hidden_mean, pooler, hidden_mean, pooler


# ---------------------------------------------------------------------------
if __name__ == "__main__":
    # Small BERT-like config: lane-dense hidden (128) and intermediate (512).
    B, S = 2, 8
    HIDDEN, HEADS, INTER, LAYERS = 128, 2, 512, 2
    VOCAB, MAX_POS, TYPES = 100, 16, 2

    key = jax.random.PRNGKey(0)
    kp, kid = jax.random.split(key, 2)
    raw = init_params(kp, vocab_size=VOCAB, max_pos=MAX_POS, type_vocab=TYPES,
                      hidden=HIDDEN, intermediate=INTER, layers=LAYERS)

    input_ids = jax.random.randint(kid, (B, S), 0, VOCAB)
    token_type_ids = ((jnp.arange(S)[None, :] >= S // 2).astype(jnp.int32)
                      * jnp.ones((B, 1), jnp.int32))
    attention_mask = jnp.ones((B, S), jnp.int32).at[1, S - 2:].set(0)  # pad last 2 of row 1

    names = ["last_hidden_state", "hidden_mean", "pooler_output",
             "hidden_mean_mlp", "pooler_output_mlp"]
    refs = reference_forward(raw, input_ids, token_type_ids, attention_mask,
                             num_heads=HEADS)

    # f32 path: tight numerical check against the pure-JAX reference.
    params_f32 = prepare_params(raw, jnp.float32, num_heads=HEADS)
    outs = pretrain_bert_crd_forward(params_f32, input_ids, token_type_ids,
                                     attention_mask, num_heads=HEADS)
    outs = jax.block_until_ready(outs)
    for n, o, r in zip(names, outs, refs):
        assert o.shape == r.shape, (n, o.shape, r.shape)
        diff = float(jnp.max(jnp.abs(o - r)))
        assert jnp.allclose(o, r, atol=2e-2, rtol=2e-2), (n, diff)

    # Default bf16 path (bf16 MXU operands + bf16 inter-layer storage): loose sanity.
    params_bf16 = prepare_params(raw, jnp.bfloat16, num_heads=HEADS)
    outs_bf = pretrain_bert_crd_forward(params_bf16, input_ids, token_type_ids,
                                        attention_mask, num_heads=HEADS)
    outs_bf = jax.block_until_ready(outs_bf)
    for n, o, r in zip(names, outs_bf, refs):
        of = o.astype(jnp.float32)
        assert bool(jnp.all(jnp.isfinite(of))), n
        assert float(jnp.max(jnp.abs(of - r))) < 0.35, (n, float(jnp.max(jnp.abs(of - r))))

    print("KERNEL_OK")
</pallas_src>

<mosaic_0001>
module attributes {stable_mosaic.version = 11 : i64} {
  func.func @_embed_kernel(%arg0: i32, %arg1: memref<1x8x128xf32, #tpu.memory_space<vmem>>, %arg2: memref<8x128xf32, #tpu.memory_space<vmem>>, %arg3: memref<1x128xf32, #tpu.memory_space<vmem>>, %arg4: memref<1x128xf32, #tpu.memory_space<vmem>>, %arg5: memref<1x8x128xf32, #tpu.memory_space<vmem>>) attributes {dimension_semantics = [#tpu.dimension_semantics<parallel>], iteration_bounds = array<i64: 2>, scalar_prefetch = 0 : i64, scratch_operands = 0 : i64, tpu.core_type = #tpu.core_type<tc>, window_params = [{transform_indices = @transform_0, window_bounds = array<i64: 1, 8, 128>}, {pipeline_mode = #tpu.pipeline_mode<synchronous>, transform_indices = @transform_1, window_bounds = array<i64: 8, 128>}, {pipeline_mode = #tpu.pipeline_mode<synchronous>, transform_indices = @transform_2, window_bounds = array<i64: 1, 128>}, {pipeline_mode = #tpu.pipeline_mode<synchronous>, transform_indices = @transform_3, window_bounds = array<i64: 1, 128>}, {transform_indices = @transform_4, window_bounds = array<i64: 1, 8, 128>}]} {
    %c0 = arith.constant 0 : index
    %c0_0 = arith.constant 0 : index
    %c0_1 = arith.constant 0 : index
    %0 = vector.load %arg1[%c0, %c0_0, %c0_1] : memref<1x8x128xf32, #tpu.memory_space<vmem>>, vector<1x8x128xf32>
    %c0_2 = arith.constant 0 : index
    %c0_3 = arith.constant 0 : index
    %1 = vector.load %arg2[%c0_2, %c0_3] : memref<8x128xf32, #tpu.memory_space<vmem>>, vector<8x128xf32>
    %2 = vector.shape_cast %1 : vector<8x128xf32> to vector<1x8x128xf32>
    %3 = arith.addf %0, %2 : vector<1x8x128xf32>
    %4 = vector.shape_cast %3 : vector<1x8x128xf32> to vector<8x128xf32>
    %c0_4 = arith.constant 0 : index
    %c0_5 = arith.constant 0 : index
    %5 = vector.load %arg3[%c0_4, %c0_5] : memref<1x128xf32, #tpu.memory_space<vmem>>, vector<1x128xf32>
    %c0_6 = arith.constant 0 : index
    %c0_7 = arith.constant 0 : index
    %6 = vector.load %arg4[%c0_6, %c0_7] : memref<1x128xf32, #tpu.memory_space<vmem>>, vector<1x128xf32>
    %cst = arith.constant dense<0.000000e+00> : vector<8xf32>
    %7 = vector.multi_reduction <add>, %4, %cst [1] : vector<8x128xf32> to vector<8xf32>
    %8 = vector.shape_cast %7 : vector<8xf32> to vector<8x1xf32>
    %cst_8 = arith.constant 1.280000e+02 : f32
    %9 = vector.broadcast %cst_8 : f32 to vector<8x1xf32>
    %10 = arith.divf %8, %9 : vector<8x1xf32>
    %11 = vector.broadcast %10 : vector<8x1xf32> to vector<8x128xf32>
    %12 = arith.subf %4, %11 : vector<8x128xf32>
    %13 = arith.mulf %12, %12 : vector<8x128xf32>
    %cst_9 = arith.constant dense<0.000000e+00> : vector<8xf32>
    %14 = vector.multi_reduction <add>, %13, %cst_9 [1] : vector<8x128xf32> to vector<8xf32>
    %15 = vector.shape_cast %14 : vector<8xf32> to vector<8x1xf32>
    %cst_10 = arith.constant 1.280000e+02 : f32
    %16 = vector.broadcast %cst_10 : f32 to vector<8x1xf32>
    %17 = arith.divf %15, %16 : vector<8x1xf32>
    %18 = vector.broadcast %10 : vector<8x1xf32> to vector<8x128xf32>
    %19 = arith.subf %4, %18 : vector<8x128xf32>
    %cst_11 = arith.constant 9.99999996E-13 : f32
    %20 = vector.broadcast %cst_11 : f32 to vector<8x1xf32>
    %21 = arith.addf %17, %20 : vector<8x1xf32>
    %22 = math.rsqrt %21 : vector<8x1xf32>
    %23 = vector.broadcast %22 : vector<8x1xf32> to vector<8x128xf32>
    %24 = arith.mulf %19, %23 : vector<8x128xf32>
    %25 = vector.broadcast %5 : vector<1x128xf32> to vector<8x128xf32>
    %26 = arith.mulf %24, %25 : vector<8x128xf32>
    %27 = vector.broadcast %6 : vector<1x128xf32> to vector<8x128xf32>
    %28 = arith.addf %26, %27 : vector<8x128xf32>
    %29 = vector.shape_cast %28 : vector<8x128xf32> to vector<1x8x128xf32>
    %c0_12 = arith.constant 0 : index
    %c0_13 = arith.constant 0 : index
    %c0_14 = arith.constant 0 : index
    %30 = vector.load %arg5[%c0_12, %c0_13, %c0_14] : memref<1x8x128xf32, #tpu.memory_space<vmem>>, vector<1x8x128xf32>
    tpu.vector_store %arg5[%c0_12, %c0_13, %c0_14], %29 {strides = array<i32>} : memref<1x8x128xf32, #tpu.memory_space<vmem>>, vector<1x8x128xf32>,
    return
  }
  func.func @transform_0(%arg0: i32) -> (i32, i32, i32) {
    %c0_i32 = arith.constant 0 : i32
    %c0_i32_0 = arith.constant 0 : i32
    %c0_i32_1 = arith.constant 0 : i32
    return %arg0, %c0_i32, %c0_i32_0 : i32, i32, i32
  }
  func.func @transform_1(%arg0: i32) -> (i32, i32) {
    %c0_i32 = arith.constant 0 : i32
    %c0_i32_0 = arith.constant 0 : i32
    %c0_i32_1 = arith.constant 0 : i32
    return %c0_i32, %c0_i32_0 : i32, i32
  }
  func.func @transform_2(%arg0: i32) -> (i32, i32) {
    %c0_i32 = arith.constant 0 : i32
    %c0_i32_0 = arith.constant 0 : i32
    %c0_i32_1 = arith.constant 0 : i32
    return %c0_i32, %c0_i32_0 : i32, i32
  }
  func.func @transform_3(%arg0: i32) -> (i32, i32) {
    %c0_i32 = arith.constant 0 : i32
    %c0_i32_0 = arith.constant 0 : i32
    %c0_i32_1 = arith.constant 0 : i32
    return %c0_i32, %c0_i32_0 : i32, i32
  }
  func.func @transform_4(%arg0: i32) -> (i32, i32, i32) {
    %c0_i32 = arith.constant 0 : i32
    %c0_i32_0 = arith.constant 0 : i32
    %c0_i32_1 = arith.constant 0 : i32
    return %arg0, %c0_i32, %c0_i32_0 : i32, i32, i32
  }
}

</mosaic_0001>

<llo_original>
// kernel: tpu_custom_call.1
$region0: #{tpu_custom_call.1}
  #allocation0 [shape = 'u32[]', space=smem, size = 0x4, offset = 0x4, fixed_abs, tag = 'smem constant byte address 0x4 - core index']
  #allocation1 [shape = 'u32[72,128]{1,0:T(1,128)}', space=vmem, size = 0x9000, scoped, tag = 'internal scratch']
  %s0 = inlined_call_operand.hbm [shape: f32[2,8,128], index: 0, kind: input, shape index: {}]
  %s1 = inlined_call_operand.hbm [shape: f32[8,128], index: 1, kind: input, shape index: {}]
  %s2 = inlined_call_operand.vmem [shape: f32[1,128], index: 2, kind: input, shape index: {}]
  %s3 = inlined_call_operand.vmem [shape: f32[1,128], index: 3, kind: input, shape index: {}]
  %s4 = inlined_call_operand.hbm [shape: f32[2,8,128], index: 4, kind: output, shape index: {}]
  %s5 = sld [smem:[#allocation0]]
  $region57: #{tpu_custom_call.1} parent=0
    _
  %s7 = ssub.s32 1, %s5
  %s8 = scalar_select 0, %s7, %s5
  $region1: #{tpu_custom_call.1} parent=0
    #allocation2 [shape = 'u8[8192]{0}', space=vmem, size = 0x2000, scoped, tag = 'input window, operand 0']
    #allocation3 [shape = 's32[2]{0}', space=sflag, size = 0x8, scoped, tag = 'scoped memory for tpu_custom_call.1']
    #allocation4 [shape = 's32[2]{0}', space=sflag, size = 0x8, scoped, tag = 'scoped memory for tpu_custom_call.1']
    #allocation5 [shape = 'u8[4096]{0}', space=vmem, size = 0x1000, scoped, tag = 'input window, operand 1, single buffered']
    #allocation6 [shape = 's32[1]{0}', space=sflag, size = 0x4, scoped, tag = 'scoped memory for tpu_custom_call.1']
    #allocation7 [shape = 'u8[8192]{0}', space=vmem, size = 0x2000, scoped, tag = 'output window, operand 0']
    %9 = vsyncpa [#allocation3], 0
    %s10 = scalar_lea.sflag [#allocation3], 1
    %11 = vsyncpa %s10, 0
    %12 = vsyncpa [#allocation6], 0
    %13 = vsyncpa [#allocation4], 0
    %s14 = scalar_lea.sflag [#allocation4], 1
    %15 = vsyncpa %s14, 0
    loop: start=0, step=1, limit=4
    $region2: #{tpu_custom_call.1} parent=1 // loop_pre_header
      _
    $region3: #{tpu_custom_call.1} parent=1 // loop_header
      %s17 = sphi 0, %s21
      %p18 = scmp.ge.s32.totalorder %s17, 4
      %s27 = sphi 0, %s29
      %s30 = sphi 0, %s27
      %s31 = sphi 0, %s30
      %s47 = sphi 0, %s31
      %s51 = sphi 0, %s51
      %s53 = sphi 0, %s51
      %s54 = sphi 0, %s53
      %s68 = sphi 0, %s54
      %s72 = sphi 0, %s72
      %s74 = sphi 0, %s72
      %s75 = sphi 0, %s74
      %s89 = sphi 0, %s75
      %s93 = sphi 0, %s93
      %s95 = sphi 0, %s93
      %s96 = sphi 0, %s95
      %s110 = sphi 0, %s96
      %s116 = sphi 0, %s118
      %s119 = sphi 0, %s116
      %s120 = sphi 0, %s119
      %s136 = sphi 0, %s120
    $region4: #{tpu_custom_call.1} parent=1 // loop_header_branch
      %20 = sbr.rel (%p18) target = $region8
    $region5: #{tpu_custom_call.1} parent=1 // loop_body
      %s22 = ssub.s32 %s17, 1
      %s23 = ssub.s32 %s17, 2
      %s24 = sadd.s32 %s17, 1
      %s25 = ssub.s32 %s17, %s24
      %p26 = scmp.eq.s32.totalorder %s25, 0
      %s28 = sadd.s32 %s27, 1
      %s29 = scalar_select %p26, %s27, %s28
      %p32 = pneg %p26
      %p33 = scmp.eq.s32.totalorder %s17, 1
      %p34 = por %p32, %p33
      %p35 = scmp.ne.s32.totalorder %s27, %s30
      %p36 = scmp.eq.s32.totalorder %s17, 0
      %p37 = por %p35, %p36
      %p38 = scmp.ne.s32.totalorder %s27, %s30
      %p39 = scmp.eq.s32.totalorder %s22, 1
      %p40 = por %p38, %p39
      %p41 = scmp.ne.s32.totalorder %s30, %s31
      %p42 = scmp.eq.s32.totalorder %s22, 0
      %p43 = por %p41, %p42
      %p44 = scmp.ne.s32.totalorder %s30, %s31
      %p45 = scmp.eq.s32.totalorder %s23, 1
      %p46 = por %p44, %p45
      %p48 = scmp.ne.s32.totalorder %s31, %s47
      %p49 = scmp.eq.s32.totalorder %s23, 0
      %p50 = por %p48, %p49
      %s52 = sadd.s32 %s51, 1
      %p55 = scmp.eq.s32.totalorder %s17, 1
      %p56 = scmp.ne.s32.totalorder %s51, %s53
      %p57 = scmp.eq.s32.totalorder %s17, 0
      %p58 = por %p56, %p57
      %p59 = scmp.ne.s32.totalorder %s51, %s53
      %p60 = scmp.eq.s32.totalorder %s22, 1
      %p61 = por %p59, %p60
      %p62 = scmp.ne.s32.totalorder %s53, %s54
      %p63 = scmp.eq.s32.totalorder %s22, 0
      %p64 = por %p62, %p63
      %p65 = scmp.ne.s32.totalorder %s53, %s54
      %p66 = scmp.eq.s32.totalorder %s23, 1
      %p67 = por %p65, %p66
      %p69 = scmp.ne.s32.totalorder %s54, %s68
      %p70 = scmp.eq.s32.totalorder %s23, 0
      %p71 = por %p69, %p70
      %s73 = sadd.s32 %s72, 1
      %p76 = scmp.eq.s32.totalorder %s17, 1
      %p77 = scmp.ne.s32.totalorder %s72, %s74
      %p78 = scmp.eq.s32.totalorder %s17, 0
      %p79 = por %p77, %p78
      %p80 = scmp.ne.s32.totalorder %s72, %s74
      %p81 = scmp.eq.s32.totalorder %s22, 1
      %p82 = por %p80, %p81
      %p83 = scmp.ne.s32.totalorder %s74, %s75
      %p84 = scmp.eq.s32.totalorder %s22, 0
      %p85 = por %p83, %p84
      %p86 = scmp.ne.s32.totalorder %s74, %s75
      %p87 = scmp.eq.s32.totalorder %s23, 1
      %p88 = por %p86, %p87
      %p90 = scmp.ne.s32.totalorder %s75, %s89
      %p91 = scmp.eq.s32.totalorder %s23, 0
      %p92 = por %p90, %p91
      %s94 = sadd.s32 %s93, 1
      %p97 = scmp.eq.s32.totalorder %s17, 1
      %p98 = scmp.ne.s32.totalorder %s93, %s95
      %p99 = scmp.eq.s32.totalorder %s17, 0
      %p100 = por %p98, %p99
      %p101 = scmp.ne.s32.totalorder %s93, %s95
      %p102 = scmp.eq.s32.totalorder %s22, 1
      %p103 = por %p101, %p102
      %p104 = scmp.ne.s32.totalorder %s95, %s96
      %p105 = scmp.eq.s32.totalorder %s22, 0
      %p106 = por %p104, %p105
      %p107 = scmp.ne.s32.totalorder %s95, %s96
      %p108 = scmp.eq.s32.totalorder %s23, 1
      %p109 = por %p107, %p108
      %p111 = scmp.ne.s32.totalorder %s96, %s110
      %p112 = scmp.eq.s32.totalorder %s23, 0
      %p113 = por %p111, %p112
      %s114 = ssub.s32 %s17, %s24
      %p115 = scmp.eq.s32.totalorder %s114, 0
      %s117 = sadd.s32 %s116, 1
      %s118 = scalar_select %p115, %s116, %s117
      %p121 = pneg %p115
      %p122 = scmp.eq.s32.totalorder %s17, 1
      %p123 = por %p121, %p122
      %p124 = scmp.ne.s32.totalorder %s116, %s119
      %p125 = scmp.eq.s32.totalorder %s17, 0
      %p126 = por %p124, %p125
      %p127 = scmp.ne.s32.totalorder %s116, %s119
      %p128 = scmp.eq.s32.totalorder %s22, 1
      %p129 = por %p127, %p128
      %p130 = scmp.ne.s32.totalorder %s119, %s120
      %p131 = scmp.eq.s32.totalorder %s22, 0
      %p132 = por %p130, %p131
      %p133 = scmp.ne.s32.totalorder %s119, %s120
      %p134 = scmp.eq.s32.totalorder %s23, 1
      %p135 = por %p133, %p134
      %p137 = scmp.ne.s32.totalorder %s120, %s136
      %p138 = scmp.eq.s32.totalorder %s23, 0
      %p139 = por %p137, %p138
      %p140 = scmp.le.s32.totalorder 1, %s17
      %p141 = scmp.lt.s32.totalorder %s17, 3
      %p142 = pnand %p140, %p141
      %p143 = pneg %p142
      // Predicated region
      $region9: #{tpu_custom_call.1} parent=5 // pred_check
        _
      $region10: #{tpu_custom_call.1} parent=5 // pred_check_branch
        %145 = sbr.rel (%p142) target = $region12
      $region11: #{tpu_custom_call.1} parent=5 // pred_region
        %s146 = ssub.s32 %s17, 1
        // Predicated region
        $region13: #{tpu_custom_call.1} parent=11 // pred_check
          %p147 = pneg %p64
        $region14: #{tpu_custom_call.1} parent=11 // pred_check_branch
          %149 = sbr.rel (%p147) target = $region16
        $region15: #{tpu_custom_call.1} parent=11 // pred_region
          %151 = vsyncadd [#allocation6], 0
          %s153 = sshll.u32 %s1, 4
          %s154 = int_to_ptr.hbm [resolvable:$true] %s153
          %s155 = sshll.u32 [#allocation5], 4
          %s156 = int_to_ptr.vmem [resolvable:$true] %s155
          %158 = dma.hbm_to_vmem [thread:$0]  %s154, 128, %s156, [#allocation6]
        $region16: #{tpu_custom_call.1} parent=11 // pred_fallthru
          _
        // Predicated region
        $region17: #{tpu_custom_call.1} parent=11 // pred_check
          %p159 = pneg %p85
        $region18: #{tpu_custom_call.1} parent=11 // pred_check_branch
          %161 = sbr.rel (%p159) target = $region20
        $region19: #{tpu_custom_call.1} parent=11 // pred_region
          _
        $region20: #{tpu_custom_call.1} parent=11 // pred_fallthru
          _
        // Predicated region
        $region21: #{tpu_custom_call.1} parent=11 // pred_check
          %p162 = pneg %p106
        $region22: #{tpu_custom_call.1} parent=11 // pred_check_branch
          %164 = sbr.rel (%p162) target = $region24
        $region23: #{tpu_custom_call.1} parent=11 // pred_region
          _
        $region24: #{tpu_custom_call.1} parent=11 // pred_fallthru
          _
      $region12: #{tpu_custom_call.1} parent=5 // pred_fallthru
        _
      %p165 = scmp.lt.s32.totalorder %s17, 2
      // Predicated region
      $region25: #{tpu_custom_call.1} parent=5 // pred_check
        %p166 = pneg %p165
      $region26: #{tpu_custom_call.1} parent=5 // pred_check_branch
        %168 = sbr.rel (%p166) target = $region28
      $region27: #{tpu_custom_call.1} parent=5 // pred_region
        // Predicated region
        $region29: #{tpu_custom_call.1} parent=27 // pred_check
          %p169 = pneg %p37
        $region30: #{tpu_custom_call.1} parent=27 // pred_check_branch
          %171 = sbr.rel (%p169) target = $region32
        $region31: #{tpu_custom_call.1} parent=27 // pred_region
          %s172 = sand.u32 %s27, 1
          %s173 = scalar_lea.sflag [#allocation3], %s172
          %s174 = sand.u32 %s27, 1
          %s175 = smul.addr %s174, 8
          %s176 = scalar_lea.vmem [#allocation2], %s175
          %178 = vsyncadd %s173, 0
          %s179 = smul.addr %s17, 8
          %s180 = scalar_lea.hbm %s0, %s179
          %s182 = sshll.u32 %s180, 4
          %s183 = int_to_ptr.hbm [resolvable:$true] %s182
          %s184 = sshll.u32 %s176, 4
          %s185 = int_to_ptr.vmem [resolvable:$true] %s184
          %187 = dma.hbm_to_vmem [thread:$0]  %s183, 128, %s185, %s173
        $region32: #{tpu_custom_call.1} parent=27 // pred_fallthru
          _
      $region28: #{tpu_custom_call.1} parent=5 // pred_fallthru
        _
      %p188 = scmp.le.s32.totalorder 1, %s17
      %p189 = scmp.lt.s32.totalorder %s17, 3
      %p190 = pnand %p188, %p189
      %p191 = pneg %p190
      // Predicated region
      $region33: #{tpu_custom_call.1} parent=5 // pred_check
        _
      $region34: #{tpu_custom_call.1} parent=5 // pred_check_branch
        %193 = sbr.rel (%p190) target = $region36
      $region35: #{tpu_custom_call.1} parent=5 // pred_region
        %s194 = ssub.s32 %s17, 1
        %s195 = sand.u32 %s30, 1
        %s196 = scalar_lea.sflag [#allocation3], %s195
        %s197 = sand.u32 %s30, 1
        %s198 = smul.addr %s197, 8
        %s199 = scalar_lea.vmem [#allocation2], %s198
        // Predicated region
        $region37: #{tpu_custom_call.1} parent=35 // pred_check
          %p200 = pneg %p43
        $region38: #{tpu_custom_call.1} parent=35 // pred_check_branch
          %202 = sbr.rel (%p200) target = $region40
        $region39: #{tpu_custom_call.1} parent=35 // pred_region
          %204 = dma.done %s196, 128
        $region40: #{tpu_custom_call.1} parent=35 // pred_fallthru
          _
        // Predicated region
        $region41: #{tpu_custom_call.1} parent=35 // pred_check
          %p205 = pneg %p64
        $region42: #{tpu_custom_call.1} parent=35 // pred_check_branch
          %207 = sbr.rel (%p205) target = $region44
        $region43: #{tpu_custom_call.1} parent=35 // pred_region
          %209 = dma.done [#allocation6], 128
        $region44: #{tpu_custom_call.1} parent=35 // pred_fallthru
          _
        %s210 = sand.u32 %s30, 1
        %s211 = scalar_lea.sflag [#allocation3], %s210
        %s212 = sand.u32 %s30, 1
        %s213 = smul.addr %s212, 8
        %s214 = scalar_lea.vmem [#allocation2], %s213
        %p215 = pneg %p43
        %p216 = pneg %p40
        %p217 = pneg %p64
        %p218 = pneg %p61
        %p219 = pneg %p85
        %p220 = pneg %p82
        %p221 = pneg %p106
        %p222 = pneg %p103
        %p223 = pneg %p132
        %p224 = pneg %p129
        %s225 = sand.u32 %s119, 1
        %s226 = scalar_lea.sflag [#allocation4], %s225
        %s227 = sand.u32 %s119, 1
        %s228 = smul.addr %s227, 8
        %s229 = scalar_lea.vmem [#allocation7], %s228
        %v230 = vld [vmem:[%s199] sm:$0xff]
        %v231 = vld [vmem:[#allocation5] sm:$0xff]
        %v232 = vadd.f32 %v230, %v231
        %v233 = vld [vmem:[%s2] sm:$0x1]
        %v234 = vld [vmem:[%s3] sm:$0x1]
        %235 = vadd.xlane.f32.xlu0 %v232
        %v236 = vpop.xlane.xlu0 %235
        %v237 = vrcp.pop 128.0
        %v238 = vmul.f32 128.0, %v237
        %v239 = vsub.f32 1.0, %v238
        %v240 = vmul.f32 %v237, %v239
        %v241 = vadd.f32 %v237, %v240
        %vm242 = vweird.f32 %v237
        %v243 = vsel %vm242, %v237, %v241
        %v244 = vmul.f32 %v236, %v243
        %v245 = vsub.f32 %v232, %v244
        %v246 = vmul.f32 %v245, %v245
        %247 = vadd.xlane.f32.xlu0 %v246
        %v248 = vpop.xlane.xlu0 %247
        %v249 = vmul.f32 %v248, %v243
        %v250 = vadd.f32 %v249, 1e-12
        %v251 = vrsqrt.pop %v250
        %v252 = vmul.f32 %v251, %v250
        %v253 = vmul.f32 %v252, %v251
        %v254 = vmul.f32 0.5, %v253
        %v255 = vsub.f32 1.5, %v254
        %v256 = vmul.f32 %v251, %v255
        %vm257 = vweird.f32 %v250
        %vm258 = vweird.f32 %v251
        %vm259 = vmor %vm257, %vm258
        %v260 = vsel %vm259, %v251, %v256
        %v261 = vmul.f32 %v245, %v260
        %v263 = vperm.slane %v233, 0
        %v265 = vmul.f32 %v261, %v263
        %v267 = vperm.slane %v234, 0
        %v269 = vadd.f32 %v265, %v267
        %270 = vst [vmem:[%s229] sm:$0xff] %v269
        %s271 = sand.u32 %s119, 1
        %s272 = scalar_lea.sflag [#allocation4], %s271
        %s273 = sand.u32 %s119, 1
        %s274 = smul.addr %s273, 8
        %s275 = scalar_lea.vmem [#allocation7], %s274
        // Predicated region
        $region45: #{tpu_custom_call.1} parent=35 // pred_check
          %p276 = pneg %p129
        $region46: #{tpu_custom_call.1} parent=35 // pred_check_branch
          %278 = sbr.rel (%p276) target = $region48
        $region47: #{tpu_custom_call.1} parent=35 // pred_region
          %280 = vsyncadd %s272, 0
          %s281 = smul.addr %s22, 8
          %s282 = scalar_lea.hbm %s4, %s281
          %s284 = sshll.u32 %s275, 4
          %s285 = int_to_ptr.vmem [resolvable:$true] %s284
          %s286 = sshll.u32 %s282, 4
          %s287 = int_to_ptr.hbm [resolvable:$true] %s286
          %289 = dma.vmem_to_hbm [thread:$0]  %s285, 128, %s287, %s272
        $region48: #{tpu_custom_call.1} parent=35 // pred_fallthru
          _
      $region36: #{tpu_custom_call.1} parent=5 // pred_fallthru
        _
      %p290 = scmp.le.s32.totalorder 2, %s17
      // Predicated region
      $region49: #{tpu_custom_call.1} parent=5 // pred_check
        %p291 = pneg %p290
      $region50: #{tpu_custom_call.1} parent=5 // pred_check_branch
        %293 = sbr.rel (%p291) target = $region52
      $region51: #{tpu_custom_call.1} parent=5 // pred_region
        %s294 = ssub.s32 %s17, 2
        // Predicated region
        $region53: #{tpu_custom_call.1} parent=51 // pred_check
          %p295 = pneg %p135
        $region54: #{tpu_custom_call.1} parent=51 // pred_check_branch
          %297 = sbr.rel (%p295) target = $region56
        $region55: #{tpu_custom_call.1} parent=51 // pred_region
          %s298 = sand.u32 %s120, 1
          %s299 = scalar_lea.sflag [#allocation4], %s298
          %s300 = sand.u32 %s120, 1
          %s301 = smul.addr %s300, 8
          %s302 = scalar_lea.vmem [#allocation7], %s301
          %304 = dma.done %s299, 128
        $region56: #{tpu_custom_call.1} parent=51 // pred_fallthru
          _
      $region52: #{tpu_custom_call.1} parent=5 // pred_fallthru
        _
    $region6: #{tpu_custom_call.1} parent=1 // loop_footer
      %s21 = sadd.s32 1, %s17
    $region7: #{tpu_custom_call.1} parent=1 // loop_footer_branch
      %16 = sbr.rel target = $region3
    $region8: #{tpu_custom_call.1} parent=1 // loop_exit
      _
    %305 = vsyncpa [#allocation3], 1
    %s306 = scalar_lea.sflag [#allocation3], 1
    %307 = vsyncpa %s306, 1
    %308 = vsyncpa [#allocation6], 1
    %309 = vsyncpa [#allocation4], 1
    %s310 = scalar_lea.sflag [#allocation4], 1
    %311 = vsyncpa %s310, 1

</llo_original>
